<compile_context>
chip_gen: v7x
topology: tpu7x:2x2x1
jax: 0.10.0
libtpu: 0.0.40
codegen_flags: <defaults>
</compile_context>

<pallas_src>
import jax
import jax.numpy as jnp
from jax.experimental import pallas as pl
from jax.experimental.pallas import tpu as pltpu


def _linear_kernel(w_ref, b_ref, x_ref, o_ref):
    # w_ref (1,1) / b_ref (1,) live in SMEM; x_ref / o_ref are lane-dense
    # (tile_rows, lane_width) VMEM tiles.  DMA/HBM-bound: do not micro-opt.
    w = w_ref[0, 0]
    b = b_ref[0]
    o_ref[...] = (x_ref[...] * w + b).astype(o_ref.dtype)


def _round_up(x, m):
    return -(-x // m) * m


_LANE_WIDTHS = (1024, 512, 256, 128)   # candidate last-dim widths (x128 lanes)
_MAX_TILE_ROWS = 1024                  # 1024x1024 f32 = 4 MiB/tile
_MIN_PALLAS_ELEMS = 16384


def linear_forward(x, weight, bias, *, min_pallas_elems=_MIN_PALLAS_ELEMS,
                   donate_input=False):
    """y = x @ weight.T + bias with weight (1, 1), bias (1,), x (..., 1)."""
    orig_shape = x.shape
    n = x.size

    # Tiny-input fast path: XLA fuses the elementwise op for free; a Pallas
    # launch (~0.35us/step + custom-call overhead) is pure loss here.
    if n < min_pallas_elems:
        return (x * weight[0, 0] + bias[0]).astype(x.dtype)

    flat = x.reshape(-1)                                   # free bitcast

    # Widest lane width that divides n -> zero-copy reshape (no pad/slice).
    lane_width = next((w for w in _LANE_WIDTHS if n % w == 0), None)
    padded = lane_width is None
    if padded:
        # Fallback only for sizes not divisible by 128: pad the tail to a
        # multiple of 1024 and slice it off afterwards (costs extra HBM
        # read+write of the array; the padded tail holds bias values and is
        # always discarded below).
        lane_width = _LANE_WIDTHS[0]
        flat = jnp.pad(flat, (0, _round_up(n, lane_width) - n))
    rows = flat.size // lane_width
    x2d = flat.reshape(rows, lane_width)                   # free bitcast

    # Row tiling: big tiles (HBM-bound), multiple of 8 sublanes, and at least
    # 2 grid steps when there is enough data so v7x's two TensorCores both
    # get work.  Ragged last block is masked by Pallas -> no row padding.
    if rows <= 8:
        tile_rows = rows                                   # single full block
    else:
        tile_rows = min(_MAX_TILE_ROWS, _round_up(pl.cdiv(rows, 2), 8))
    grid = (pl.cdiv(rows, tile_rows),)

    # Aliasing the x slab with the output is only safe when the caller does
    # not reuse x afterwards (opt-in).
    aliases = {2: 0} if donate_input else {}

    out = pl.pallas_call(
        _linear_kernel,
        out_shape=jax.ShapeDtypeStruct((rows, lane_width), x.dtype),
        grid_spec=pltpu.PrefetchScalarGridSpec(
            num_scalar_prefetch=0,
            grid=grid,
            in_specs=[
                pl.BlockSpec(memory_space=pltpu.SMEM),        # weight (1, 1)
                pl.BlockSpec(memory_space=pltpu.SMEM),        # bias (1,)
                pl.BlockSpec((tile_rows, lane_width), lambda i: (i, 0)),
            ],
            out_specs=pl.BlockSpec((tile_rows, lane_width), lambda i: (i, 0)),
        ),
        compiler_params=pltpu.CompilerParams(
            # v7x: shard row tiles across the 2 TensorCores; no-op on v5e/v6e.
            dimension_semantics=("parallel",),
            # 16 MiB of double-buffered tiles; lift v5e's 16 MiB scoped
            # default, stay well under v7x's 64 MiB physical VMEM.
            vmem_limit_bytes=32 * 1024 * 1024,
        ),
        input_output_aliases=aliases,
    )(weight, bias, x2d)

    if padded:
        return out.reshape(-1)[:n].reshape(orig_shape)
    return out.reshape(orig_shape)                          # free bitcast


def init_params(key):
    # Mimics nn.Linear(1, 1) init: U(-1/sqrt(fan_in), 1/sqrt(fan_in)), fan_in=1.
    kw, kb = jax.random.split(key)
    weight = jax.random.uniform(kw, (1, 1), jnp.float32, minval=-1.0, maxval=1.0)
    bias = jax.random.uniform(kb, (1,), jnp.float32, minval=-1.0, maxval=1.0)
    return weight, bias


if __name__ == "__main__":
    key = jax.random.PRNGKey(0)
    k_param, k1, k2, k3 = jax.random.split(key, 4)
    weight, bias = init_params(k_param)

    # Small batch consistent with nn.Linear(1, 1).
    x_small = jax.random.normal(k1, (8, 1), jnp.float32)
    # Non-128-divisible batch: exercises the pad fallback path.
    x_unaligned = jax.random.normal(k2, (3000, 1), jnp.float32)
    # 1024-divisible batch: zero-copy path, 2-tile parallel grid, ragged block.
    x_aligned = jax.random.normal(k3, (40960, 1), jnp.float32)

    # Force the Pallas path (min_pallas_elems=0) so the kernel itself runs.
    y_small = jax.block_until_ready(
        linear_forward(x_small, weight, bias, min_pallas_elems=0))
    # Pad path with input donation (padded slab is a temporary -> safe).
    y_unaligned = jax.block_until_ready(
        linear_forward(x_unaligned, weight, bias, min_pallas_elems=0,
                       donate_input=True))
    # Zero-copy multi-tile path under jit (the common production use).
    jit_fwd = jax.jit(lambda xx, ww, bb: linear_forward(xx, ww, bb,
                                                        min_pallas_elems=0))
    y_aligned = jax.block_until_ready(jit_fwd(x_aligned, weight, bias))

    # Reference checks in plain JAX.
    ref_small = x_small @ weight.T + bias
    ref_unaligned = x_unaligned @ weight.T + bias
    ref_aligned = x_aligned @ weight.T + bias
    assert y_small.shape == x_small.shape
    assert y_unaligned.shape == x_unaligned.shape
    assert y_aligned.shape == x_aligned.shape
    assert jnp.allclose(y_small, ref_small, atol=1e-6), "small batch mismatch"
    assert jnp.allclose(y_unaligned, ref_unaligned, atol=1e-6), "pad-path mismatch"
    assert jnp.allclose(y_aligned, ref_aligned, atol=1e-6), "aligned-path mismatch"

    print("KERNEL_OK")
</pallas_src>

<mosaic_0001>
module attributes {stable_mosaic.version = 11 : i64} {
  func.func @_linear_kernel(%arg0: i32, %arg1: memref<1x1xf32, #tpu.memory_space<smem>>, %arg2: memref<1xf32, #tpu.memory_space<smem>>, %arg3: memref<1x1024xf32, #tpu.memory_space<vmem>>, %arg4: memref<1x1024xf32, #tpu.memory_space<vmem>>) attributes {dimension_semantics = [#tpu.dimension_semantics<parallel>], iteration_bounds = array<i64: 1>, scalar_prefetch = 0 : i64, scratch_operands = 0 : i64, tpu.core_type = #tpu.core_type<tc>, window_params = [{transform_indices = @transform_0, window_bounds = array<i64: 1, 1>}, {transform_indices = @transform_1, window_bounds = array<i64: 1>}, {transform_indices = @transform_2, window_bounds = array<i64: 1, 1024>}, {transform_indices = @transform_3, window_bounds = array<i64: 1, 1024>}]} {
    %c0 = arith.constant 0 : index
    %c0_0 = arith.constant 0 : index
    %0 = memref.load %arg1[%c0, %c0_0] : memref<1x1xf32, #tpu.memory_space<smem>>
    %c0_1 = arith.constant 0 : index
    %1 = memref.load %arg2[%c0_1] : memref<1xf32, #tpu.memory_space<smem>>
    %c0_2 = arith.constant 0 : index
    %c0_3 = arith.constant 0 : index
    %2 = vector.load %arg3[%c0_2, %c0_3] : memref<1x1024xf32, #tpu.memory_space<vmem>>, vector<1x1024xf32>
    %3 = vector.broadcast %0 : f32 to vector<1x1024xf32>
    %4 = arith.mulf %2, %3 : vector<1x1024xf32>
    %5 = vector.broadcast %1 : f32 to vector<1x1024xf32>
    %6 = arith.addf %4, %5 : vector<1x1024xf32>
    %c0_4 = arith.constant 0 : index
    %c0_5 = arith.constant 0 : index
    %7 = vector.load %arg4[%c0_4, %c0_5] : memref<1x1024xf32, #tpu.memory_space<vmem>>, vector<1x1024xf32>
    tpu.vector_store %arg4[%c0_4, %c0_5], %6 {strides = array<i32>} : memref<1x1024xf32, #tpu.memory_space<vmem>>, vector<1x1024xf32>,
    return
  }
  func.func @transform_0(%arg0: i32) -> (i32, i32) {
    %c0_i32 = arith.constant 0 : i32
    %c0_i32_0 = arith.constant 0 : i32
    %c0_i32_1 = arith.constant 0 : i32
    return %c0_i32, %c0_i32_0 : i32, i32
  }
  func.func @transform_1(%arg0: i32) -> i32 {
    %c0_i32 = arith.constant 0 : i32
    %c0_i32_0 = arith.constant 0 : i32
    return %c0_i32 : i32
  }
  func.func @transform_2(%arg0: i32) -> (i32, i32) {
    %c0_i32 = arith.constant 0 : i32
    %c0_i32_0 = arith.constant 0 : i32
    return %arg0, %c0_i32 : i32, i32
  }
  func.func @transform_3(%arg0: i32) -> (i32, i32) {
    %c0_i32 = arith.constant 0 : i32
    %c0_i32_0 = arith.constant 0 : i32
    return %arg0, %c0_i32 : i32, i32
  }
}

</mosaic_0001>

<llo_original>
// kernel: tpu_custom_call.1
$region0: #{tpu_custom_call.1}
  #allocation0 [shape = 'u32[]', space=smem, size = 0x4, offset = 0x4, fixed_abs, tag = 'smem constant byte address 0x4 - core index']
  #allocation1 [shape = 'u32[144,128]{1,0:T(1,128)}', space=vmem, size = 0x12000, scoped, tag = 'internal scratch']
  #allocation2 [shape = 'f32[1,1]{1,0:T(1,128)S(6)}', space=smem, size = 0x200, scoped, tag = 'scoped memory for tpu_custom_call.1']
  #allocation3 [shape = 'f32[1]{0:T(128)S(6)}', space=smem, size = 0x200, scoped, tag = 'scoped memory for tpu_custom_call.1']
  %s0 = inlined_call_operand.<no memory space> [shape: f32[1,1], index: 0, kind: input, shape index: {}]
  %s1 = inlined_call_operand.<no memory space> [shape: f32[1], index: 1, kind: input, shape index: {}]
  %s2 = inlined_call_operand.hbm [shape: f32[1,1024], index: 2, kind: input, shape index: {}]
  %s3 = inlined_call_operand.hbm [shape: f32[1,1024], index: 3, kind: output, shape index: {}]
  %s4 = sld [smem:[#allocation0]]
  $region26: #{tpu_custom_call.1} parent=0
    _
  %s6 = ssub.s32 1, %s4
  %s7 = scalar_select 0, %s6, %s4
  %8 = sst [smem:[#allocation2]] %s0
  %9 = sst [smem:[#allocation3]] %s1
  $region1: #{tpu_custom_call.1} parent=0
    #allocation4 [shape = 'u8[4096]{0}', space=vmem, size = 0x1000, scoped, tag = 'input window, operand 2, single buffered']
    #allocation5 [shape = 's32[1]{0}', space=sflag, size = 0x4, scoped, tag = 'scoped memory for tpu_custom_call.1']
    #allocation6 [shape = 's32[1]{0}', space=sflag, size = 0x4, scoped, tag = 'scoped memory for tpu_custom_call.1']
    #allocation7 [shape = 'u8[4096]{0}', space=vmem, size = 0x1000, scoped, tag = 'output window, operand 0, single buffered']
    %10 = vsyncpa [#allocation5], 0
    %11 = vsyncpa [#allocation6], 0
    // Predicated region
    $region2: #{tpu_custom_call.1} parent=1 // pred_check
      _
    $region3: #{tpu_custom_call.1} parent=1 // pred_check_branch
      %13 = sbr.rel (0) target = $region5
    $region4: #{tpu_custom_call.1} parent=1 // pred_region
      _
    $region5: #{tpu_custom_call.1} parent=1 // pred_fallthru
      _
    // Predicated region
    $region6: #{tpu_custom_call.1} parent=1 // pred_check
      _
    $region7: #{tpu_custom_call.1} parent=1 // pred_check_branch
      %15 = sbr.rel (0) target = $region9
    $region8: #{tpu_custom_call.1} parent=1 // pred_region
      _
    $region9: #{tpu_custom_call.1} parent=1 // pred_fallthru
      _
    // Predicated region
    $region10: #{tpu_custom_call.1} parent=1 // pred_check
      _
    $region11: #{tpu_custom_call.1} parent=1 // pred_check_branch
      %17 = sbr.rel (0) target = $region13
    $region12: #{tpu_custom_call.1} parent=1 // pred_region
      %s19 = ssub.s32 128, 128
      %20 = vsyncadd [#allocation5], %s19
      %s22 = sshll.u32 [#allocation4], 4
      %s23 = int_to_ptr.vmem [resolvable:$true] %s22
      %25 = dma.hbm_to_vmem [thread:$0]  %s2, 128, %s23, [#allocation5]
    $region13: #{tpu_custom_call.1} parent=1 // pred_fallthru
      _
    // Predicated region
    $region14: #{tpu_custom_call.1} parent=1 // pred_check
      _
    $region15: #{tpu_custom_call.1} parent=1 // pred_check_branch
      %27 = sbr.rel (0) target = $region17
    $region16: #{tpu_custom_call.1} parent=1 // pred_region
      %28 = dma.done [#allocation5], 128
    $region17: #{tpu_custom_call.1} parent=1 // pred_fallthru
      _
    %s29 = sld [smem:[#allocation2]]
    %s30 = sld [smem:[#allocation3]]
    %v31 = vld [vmem:[#allocation4] sm:$0xff]
    %v32 = vstv %s29
    %v33 = vmul.f32 %v31, %v32
    %v34 = vstv %s30
    %v35 = vadd.f32 %v33, %v34
    %36 = vst [vmem:[#allocation7] sm:$0xff] %v35
    // Predicated region
    $region18: #{tpu_custom_call.1} parent=1 // pred_check
      _
    $region19: #{tpu_custom_call.1} parent=1 // pred_check_branch
      %38 = sbr.rel (0) target = $region21
    $region20: #{tpu_custom_call.1} parent=1 // pred_region
      %s40 = ssub.s32 128, 128
      %41 = vsyncadd [#allocation6], %s40
      %s43 = sshll.u32 [#allocation7], 4
      %s44 = int_to_ptr.vmem [resolvable:$true] %s43
      %46 = dma.vmem_to_hbm [thread:$0]  %s44, 128, %s3, [#allocation6]
    $region21: #{tpu_custom_call.1} parent=1 // pred_fallthru
      _
    // Predicated region
    $region22: #{tpu_custom_call.1} parent=1 // pred_check
      _
    $region23: #{tpu_custom_call.1} parent=1 // pred_check_branch
      %48 = sbr.rel (0) target = $region25
    $region24: #{tpu_custom_call.1} parent=1 // pred_region
      %49 = dma.done [#allocation6], 128
    $region25: #{tpu_custom_call.1} parent=1 // pred_fallthru
      _
    %50 = vsyncpa [#allocation5], 1
    %51 = vsyncpa [#allocation6], 1

</llo_original>
